<compile_context>
chip_gen: v7x
topology: tpu7x:2x2x1
jax: 0.10.0
libtpu: 0.0.40
codegen_flags: <defaults>
</compile_context>

<pallas_src>
import jax
import jax.numpy as jnp
from jax.experimental import pallas as pl
from jax.experimental.pallas import tpu as pltpu


def _round_up(x: int, m: int) -> int:
    return ((x + m - 1) // m) * m


# ----------------------------------------------------------------------------
# One-time (parameter-init time) weight preparation.
# ----------------------------------------------------------------------------
def prepare_down_projection_weight(weight, lane: int = 128):
    """Fold the (E,S,I)->(E,I,S) output permute into the weight and make it lane-dense.

    weight: (n_spherical, n_radial, emb_size_interm)
    Returns w2d: (n_radial, IS_pad) with w2d[r, i*S + s] = weight[s, r, i] and zero
    columns appended so IS_pad is a multiple of `lane` (unmasked kernel stores).
    """
    n_spherical, n_radial, emb_size_interm = weight.shape
    IS = emb_size_interm * n_spherical
    IS_pad = max(_round_up(IS, lane), lane)
    w2d = jnp.transpose(weight, (1, 2, 0)).reshape(n_radial, IS)
    if IS_pad != IS:
        w2d = jnp.pad(w2d, ((0, 0), (0, IS_pad - IS)))
    return w2d


# ----------------------------------------------------------------------------
# VMEM budgeting / tile sizing (generation-safe defaults).
# ----------------------------------------------------------------------------
_DEFAULT_VMEM_BUDGET = 16 * 1024 * 1024  # fits v5e's 16 MiB scoped default; far under v7x 64 MiB/TC


def _vmem_step_bytes(block_e: int, n_radial: int, is_pad: int, out_bytes: int):
    """Approximate per-step VMEM footprint (double-buffered in/out tiles + resident weight)."""
    r_pad = max(_round_up(n_radial, 128), 128)            # rbf tile is lane-padded in VMEM
    weight_bytes = 2 * _round_up(n_radial, 8) * is_pad * 4
    per_row = 2 * r_pad * 4 + 2 * is_pad * out_bytes      # 2x = double buffering
    return weight_bytes + block_e * per_row, per_row, weight_bytes


def _choose_block_e(E: int, n_radial: int, is_pad: int, out_bytes: int,
                    vmem_budget_bytes: int, max_block_e: int) -> int:
    _, per_row, weight_bytes = _vmem_step_bytes(8, n_radial, is_pad, out_bytes)
    budget = max(vmem_budget_bytes - weight_bytes, 8 * per_row)
    block_e = (budget // per_row) // 8 * 8
    block_e = max(8, min(block_e, max_block_e))
    # Keep >= 2 grid steps so both v7x TensorCores get work on the "parallel" axis
    # (one extra ~0.35 us grid step is negligible on single-TC v5e/v6e).
    two_core_cap = max(_round_up((E + 1) // 2, 8), 8)
    block_e = min(block_e, two_core_cap, max(_round_up(E, 8), 8))
    return block_e


# ----------------------------------------------------------------------------
# Pallas kernel: (block_e, R) x (R, IS_pad) -> (block_e, IS_pad), f32 accumulation.
# ----------------------------------------------------------------------------
def _down_proj_kernel(rbf_ref, w_ref, out_ref):
    out_ref[...] = jnp.dot(
        rbf_ref[...], w_ref[...], preferred_element_type=jnp.float32
    ).astype(out_ref.dtype)


# ----------------------------------------------------------------------------
# Forward.
# ----------------------------------------------------------------------------
def efficient_interaction_down_projection(
    rbf,
    sph,
    id_st,
    id_ragged_idx,
    weight,
    *,
    kmax=None,
    w2d=None,
    out_dtype=None,
    block_e=None,
    pallas_min_rows: int = 64,
    vmem_budget_bytes: int = _DEFAULT_VMEM_BUDGET,
    max_block_e: int = 1024,
):
    """JAX/Pallas equivalent of EfficientInteractionDownProjection.forward.

    Args:
      rbf:           (1, E, n_radial) float
      sph:           (E, n_spherical) float
      id_st:         (E,) int
      id_ragged_idx: (E,) int
      weight:        (n_spherical, n_radial, emb_size_interm) float
      kmax:          static int = max(id_ragged_idx) + 1 (pass it to stay jittable)
      w2d:           optional pre-prepared weight from prepare_down_projection_weight()
                     (prepare once at init time; avoids a per-call transpose/pad)
      out_dtype:     dtype of rbf_W1 (e.g. jnp.bfloat16 if the consumer tolerates it;
                     kernel accumulates in f32 regardless)

    Returns:
      rbf_W1: (E, emb_size_interm, n_spherical)
      sph2:   (E, n_spherical, Kmax)
    """
    n_spherical, n_radial, emb_size_interm = weight.shape
    E = rbf.shape[1]
    IS = emb_size_interm * n_spherical
    out_dtype = rbf.dtype if out_dtype is None else jnp.dtype(out_dtype)
    out_bytes = jnp.dtype(out_dtype).itemsize

    if w2d is None:
        # Fallback: prefer hoisting this to parameter-init time via
        # prepare_down_projection_weight and passing the result in.
        w2d = prepare_down_projection_weight(weight)
    IS_pad = int(w2d.shape[1])

    rbf2d = rbf[0]  # (E, n_radial)

    if E >= pallas_min_rows:
        if block_e is None:
            block_e_eff = _choose_block_e(E, n_radial, IS_pad, out_bytes,
                                          vmem_budget_bytes, max_block_e)
        else:
            block_e_eff = max(8, min(_round_up(block_e, 8), max(_round_up(E, 8), 8)))
        grid = (pl.cdiv(E, block_e_eff),)  # partial last block is masked by Pallas

        footprint, _, _ = _vmem_step_bytes(block_e_eff, n_radial, IS_pad, out_bytes)
        vmem_limit = int(min(48 * 1024 * 1024, max(2 * footprint, 16 * 1024 * 1024)))

        out2d = pl.pallas_call(
            _down_proj_kernel,
            out_shape=jax.ShapeDtypeStruct((E, IS_pad), out_dtype),
            grid_spec=pltpu.PrefetchScalarGridSpec(
                num_scalar_prefetch=0,
                grid=grid,
                in_specs=[
                    # TODO(synk): if profiles show the lane-padded n_radial read dominating,
                    # pre-pack rbf into a lane-dense (E/g, g*R) slab or fuse into rbf's producer.
                    pl.BlockSpec((block_e_eff, n_radial), lambda i: (i, 0)),
                    # Constant index_map: tiny (R, IS_pad) weight stays resident in VMEM.
                    pl.BlockSpec((n_radial, IS_pad), lambda i: (0, 0)),
                ],
                # IS_pad is a multiple of 128 -> fully lane-dense, unmasked stores.
                out_specs=pl.BlockSpec((block_e_eff, IS_pad), lambda i: (i, 0)),
            ),
            compiler_params=pltpu.CompilerParams(
                dimension_semantics=("parallel",),
                vmem_limit_bytes=vmem_limit,
            ),
            cost_estimate=pl.CostEstimate(
                flops=int(2 * E * n_radial * IS_pad),
                transcendentals=0,
                bytes_accessed=int(4 * E * n_radial + 4 * n_radial * IS_pad
                                   + out_bytes * E * IS_pad),
            ),
        )(rbf2d, w2d)
    else:
        # Launch + pipeline prologue dominate for tiny E; plain matmul is faster there.
        out2d = jnp.dot(rbf2d, w2d, preferred_element_type=jnp.float32).astype(out_dtype)

    if IS_pad != IS:
        # TODO(synk): let the downstream EfficientInteractionBilinear consume the padded slab
        # (or fuse its bmm here) so this strip pass / full HBM round-trip of rbf_W1 disappears.
        out2d = out2d[:, :IS]
    rbf_W1 = out2d.reshape(E, emb_size_interm, n_spherical)

    # ---- ragged scatter of sph ----
    if kmax is None:
        # TODO(synk): dynamic Kmax (data-dependent output shape) has no jittable equivalent;
        # prefer passing kmax statically from the neighbor-list build. Host-sync fallback:
        if E == 0 or sph.shape[0] == 0:
            kmax = 0
        else:
            kmax = int(jax.device_get(jnp.max(id_ragged_idx))) + 1
    Kmax = max(int(kmax), 0)

    sph2 = jnp.zeros((E, n_spherical, Kmax), dtype=sph.dtype)
    if Kmax > 0 and E > 0:
        # Assumes unique (id_st, id_ragged_idx) pairs and id_ragged_idx < Kmax (torch index
        # assignment semantics); out-of-range indices are silently dropped by jnp scatter.
        # TODO(synk): fuse this lane-padded (Kmax ~ small in the lane dim) scatter with the
        # downstream bilinear bmm to avoid the ~(128/Kmax)x inflated HBM write pass.
        sph2 = sph2.at[id_st, :, id_ragged_idx].set(sph)

    return rbf_W1, sph2


# ----------------------------------------------------------------------------
# Demo / self-check.
# ----------------------------------------------------------------------------
if __name__ == "__main__":

    def run_case(E, n_spherical, n_radial, emb_size_interm, Kmax, seed):
        key = jax.random.PRNGKey(seed)
        k_rbf, k_sph, k_w = jax.random.split(key, 3)

        rbf = jax.random.normal(k_rbf, (1, E, n_radial), dtype=jnp.float32)
        sph = jax.random.normal(k_sph, (E, n_spherical), dtype=jnp.float32)

        # Ragged neighbor structure: groups of Kmax source edges per target edge.
        id_st = jnp.arange(E, dtype=jnp.int32) // Kmax
        id_ragged_idx = jnp.arange(E, dtype=jnp.int32) % Kmax

        # Deterministic weight init (glorot-style scaling stands in for glorot_orthogonal).
        scale = jnp.sqrt(2.0 / (n_radial + emb_size_interm)).astype(jnp.float32)
        weight = scale * jax.random.normal(
            k_w, (n_spherical, n_radial, emb_size_interm), dtype=jnp.float32
        )

        # Hoisted once-per-parameter weight prep (permute-fold + lane pad).
        w2d = prepare_down_projection_weight(weight)

        fwd = jax.jit(
            efficient_interaction_down_projection,
            static_argnames=("kmax", "out_dtype", "block_e", "pallas_min_rows",
                             "vmem_budget_bytes", "max_block_e"),
        )
        rbf_W1, sph2 = fwd(rbf, sph, id_st, id_ragged_idx, weight, kmax=Kmax, w2d=w2d)
        rbf_W1, sph2 = jax.block_until_ready((rbf_W1, sph2))

        # Reference: pure-JAX einsum equivalent of torch matmul + permute(1,2,0).
        ref_W1 = jnp.transpose(jnp.einsum("er,sri->sei", rbf[0], weight), (1, 2, 0))
        assert rbf_W1.shape == (E, emb_size_interm, n_spherical)
        assert jnp.allclose(rbf_W1, ref_W1, atol=1e-5, rtol=1e-5)

        # Reference ragged scatter (torch semantics: scatter then transpose(1,2)).
        ref_sph2 = (
            jnp.zeros((E, Kmax, n_spherical), dtype=sph.dtype)
            .at[id_st, id_ragged_idx]
            .set(sph)
        )
        ref_sph2 = jnp.transpose(ref_sph2, (0, 2, 1))
        assert sph2.shape == (E, n_spherical, Kmax)
        assert jnp.allclose(sph2, ref_sph2)

    # Case 1: IS = 16*8 = 128 -> already lane-dense, no padding / strip pass.
    run_case(E=256, n_spherical=8, n_radial=8, emb_size_interm=16, Kmax=3, seed=0)
    # Case 2: IS = 16*7 = 112 -> exercises the zero-pad-to-128 + strip path.
    run_case(E=256, n_spherical=7, n_radial=8, emb_size_interm=16, Kmax=3, seed=1)

    print("KERNEL_OK")
</pallas_src>

<mosaic_0001>
module attributes {stable_mosaic.version = 11 : i64} {
  func.func @_down_proj_kernel(%arg0: i32, %arg1: memref<128x8xf32, #tpu.memory_space<vmem>>, %arg2: memref<8x128xf32, #tpu.memory_space<vmem>>, %arg3: memref<128x128xf32, #tpu.memory_space<vmem>>) attributes {dimension_semantics = [#tpu.dimension_semantics<parallel>], iteration_bounds = array<i64: 2>, scalar_prefetch = 0 : i64, scratch_operands = 0 : i64, tpu.core_type = #tpu.core_type<tc>, window_params = [{transform_indices = @transform_0, window_bounds = array<i64: 128, 8>}, {pipeline_mode = #tpu.pipeline_mode<synchronous>, transform_indices = @transform_1, window_bounds = array<i64: 8, 128>}, {transform_indices = @transform_2, window_bounds = array<i64: 128, 128>}]} {
    %c0 = arith.constant 0 : index
    %c0_0 = arith.constant 0 : index
    %0 = vector.load %arg1[%c0, %c0_0] : memref<128x8xf32, #tpu.memory_space<vmem>>, vector<128x8xf32>
    %c0_1 = arith.constant 0 : index
    %c0_2 = arith.constant 0 : index
    %1 = vector.load %arg2[%c0_1, %c0_2] : memref<8x128xf32, #tpu.memory_space<vmem>>, vector<8x128xf32>
    %cst = arith.constant dense<0.000000e+00> : vector<128x128xf32>
    %2 = tpu.matmul %0, %1, %cst {dimension_numbers = #tpu.dot_dimension_numbers<[1], [0], [0], [1], [0, 0, 1, 1], [], []>} : vector<128x8xf32>, vector<8x128xf32>, vector<128x128xf32> -> vector<128x128xf32>
    %c0_3 = arith.constant 0 : index
    %c0_4 = arith.constant 0 : index
    %3 = vector.load %arg3[%c0_3, %c0_4] : memref<128x128xf32, #tpu.memory_space<vmem>>, vector<128x128xf32>
    tpu.vector_store %arg3[%c0_3, %c0_4], %2 {strides = array<i32>} : memref<128x128xf32, #tpu.memory_space<vmem>>, vector<128x128xf32>,
    return
  }
  func.func @transform_0(%arg0: i32) -> (i32, i32) {
    %c0_i32 = arith.constant 0 : i32
    %c0_i32_0 = arith.constant 0 : i32
    return %arg0, %c0_i32 : i32, i32
  }
  func.func @transform_1(%arg0: i32) -> (i32, i32) {
    %c0_i32 = arith.constant 0 : i32
    %c0_i32_0 = arith.constant 0 : i32
    %c0_i32_1 = arith.constant 0 : i32
    return %c0_i32, %c0_i32_0 : i32, i32
  }
  func.func @transform_2(%arg0: i32) -> (i32, i32) {
    %c0_i32 = arith.constant 0 : i32
    %c0_i32_0 = arith.constant 0 : i32
    return %arg0, %c0_i32 : i32, i32
  }
}

</mosaic_0001>

<llo_original>
// kernel: efficient_interaction_down_projection.1
$region0: #{efficient_interaction_down_projection.1}
  #allocation0 [shape = 'u32[]', space=smem, size = 0x4, offset = 0x4, fixed_abs, tag = 'smem constant byte address 0x4 - core index']
  #allocation1 [shape = 'u32[144,128]{1,0:T(1,128)}', space=vmem, size = 0x12000, scoped, tag = 'internal scratch']
  %s0 = inlined_call_operand.vmem [shape: f32[256,8], index: 0, kind: input, shape index: {}]
  %s1 = inlined_call_operand.vmem [shape: f32[8,128], index: 1, kind: input, shape index: {}]
  %s2 = inlined_call_operand.vmem [shape: f32[256,128], index: 2, kind: output, shape index: {}]
  %s3 = sld [smem:[#allocation0]]
  $region41: #{efficient_interaction_down_projection.1} parent=0
    _
  %s5 = ssub.s32 1, %s3
  %s6 = scalar_select 0, %s5, %s3
  loop: start=0, step=1, limit=4
  $region2: #{efficient_interaction_down_projection.1} parent=0 // loop_pre_header
    _
  $region3: #{efficient_interaction_down_projection.1} parent=0 // loop_header
    %s8 = sphi 0, %s12
    %p9 = scmp.ge.s32.totalorder %s8, 4
    %s18 = sphi 0, %s20
    %s21 = sphi 0, %s18
    %s22 = sphi 0, %s21
    %s38 = sphi 0, %s22
    %s42 = sphi 0, %s42
    %s44 = sphi 0, %s42
    %s45 = sphi 0, %s44
    %s59 = sphi 0, %s45
    %s65 = sphi 0, %s67
    %s68 = sphi 0, %s65
    %s69 = sphi 0, %s68
    %s85 = sphi 0, %s69
  $region4: #{efficient_interaction_down_projection.1} parent=0 // loop_header_branch
    %11 = sbr.rel (%p9) target = $region8
  $region5: #{efficient_interaction_down_projection.1} parent=0 // loop_body
    %s13 = ssub.s32 %s8, 1
    %s14 = ssub.s32 %s8, 2
    %s15 = sadd.s32 %s8, 1
    %s16 = ssub.s32 %s8, %s15
    %p17 = scmp.eq.s32.totalorder %s16, 0
    %s19 = sadd.s32 %s18, 1
    %s20 = scalar_select %p17, %s18, %s19
    %p23 = pneg %p17
    %p24 = scmp.eq.s32.totalorder %s8, 1
    %p25 = por %p23, %p24
    %p26 = scmp.ne.s32.totalorder %s18, %s21
    %p27 = scmp.eq.s32.totalorder %s8, 0
    %p28 = por %p26, %p27
    %p29 = scmp.ne.s32.totalorder %s18, %s21
    %p30 = scmp.eq.s32.totalorder %s13, 1
    %p31 = por %p29, %p30
    %p32 = scmp.ne.s32.totalorder %s21, %s22
    %p33 = scmp.eq.s32.totalorder %s13, 0
    %p34 = por %p32, %p33
    %p35 = scmp.ne.s32.totalorder %s21, %s22
    %p36 = scmp.eq.s32.totalorder %s14, 1
    %p37 = por %p35, %p36
    %p39 = scmp.ne.s32.totalorder %s22, %s38
    %p40 = scmp.eq.s32.totalorder %s14, 0
    %p41 = por %p39, %p40
    %s43 = sadd.s32 %s42, 1
    %p46 = scmp.eq.s32.totalorder %s8, 1
    %p47 = scmp.ne.s32.totalorder %s42, %s44
    %p48 = scmp.eq.s32.totalorder %s8, 0
    %p49 = por %p47, %p48
    %p50 = scmp.ne.s32.totalorder %s42, %s44
    %p51 = scmp.eq.s32.totalorder %s13, 1
    %p52 = por %p50, %p51
    %p53 = scmp.ne.s32.totalorder %s44, %s45
    %p54 = scmp.eq.s32.totalorder %s13, 0
    %p55 = por %p53, %p54
    %p56 = scmp.ne.s32.totalorder %s44, %s45
    %p57 = scmp.eq.s32.totalorder %s14, 1
    %p58 = por %p56, %p57
    %p60 = scmp.ne.s32.totalorder %s45, %s59
    %p61 = scmp.eq.s32.totalorder %s14, 0
    %p62 = por %p60, %p61
    %s63 = ssub.s32 %s8, %s15
    %p64 = scmp.eq.s32.totalorder %s63, 0
    %s66 = sadd.s32 %s65, 1
    %s67 = scalar_select %p64, %s65, %s66
    %p70 = pneg %p64
    %p71 = scmp.eq.s32.totalorder %s8, 1
    %p72 = por %p70, %p71
    %p73 = scmp.ne.s32.totalorder %s65, %s68
    %p74 = scmp.eq.s32.totalorder %s8, 0
    %p75 = por %p73, %p74
    %p76 = scmp.ne.s32.totalorder %s65, %s68
    %p77 = scmp.eq.s32.totalorder %s13, 1
    %p78 = por %p76, %p77
    %p79 = scmp.ne.s32.totalorder %s68, %s69
    %p80 = scmp.eq.s32.totalorder %s13, 0
    %p81 = por %p79, %p80
    %p82 = scmp.ne.s32.totalorder %s68, %s69
    %p83 = scmp.eq.s32.totalorder %s14, 1
    %p84 = por %p82, %p83
    %p86 = scmp.ne.s32.totalorder %s69, %s85
    %p87 = scmp.eq.s32.totalorder %s14, 0
    %p88 = por %p86, %p87
    %p89 = scmp.le.s32.totalorder 1, %s8
    %p90 = scmp.lt.s32.totalorder %s8, 3
    %p91 = pnand %p89, %p90
    %p92 = pneg %p91
    // Predicated region
    $region9: #{efficient_interaction_down_projection.1} parent=5 // pred_check
      _
    $region10: #{efficient_interaction_down_projection.1} parent=5 // pred_check_branch
      %94 = sbr.rel (%p91) target = $region12
    $region11: #{efficient_interaction_down_projection.1} parent=5 // pred_region
      %s95 = ssub.s32 %s8, 1
      // Predicated region
      $region13: #{efficient_interaction_down_projection.1} parent=11 // pred_check
        %p96 = pneg %p55
      $region14: #{efficient_interaction_down_projection.1} parent=11 // pred_check_branch
        %98 = sbr.rel (%p96) target = $region16
      $region15: #{efficient_interaction_down_projection.1} parent=11 // pred_region
        _
      $region16: #{efficient_interaction_down_projection.1} parent=11 // pred_fallthru
        _
    $region12: #{efficient_interaction_down_projection.1} parent=5 // pred_fallthru
      _
    %p99 = scmp.lt.s32.totalorder %s8, 2
    // Predicated region
    $region17: #{efficient_interaction_down_projection.1} parent=5 // pred_check
      %p100 = pneg %p99
    $region18: #{efficient_interaction_down_projection.1} parent=5 // pred_check_branch
      %102 = sbr.rel (%p100) target = $region20
    $region19: #{efficient_interaction_down_projection.1} parent=5 // pred_region
      // Predicated region
      $region21: #{efficient_interaction_down_projection.1} parent=19 // pred_check
        %p103 = pneg %p28
      $region22: #{efficient_interaction_down_projection.1} parent=19 // pred_check_branch
        %105 = sbr.rel (%p103) target = $region24
      $region23: #{efficient_interaction_down_projection.1} parent=19 // pred_region
        %s106 = smul.u32 16, %s8
        %p107 = scmp.lt.s32.totalorder %s106, 31
        %s108 = scalar_select %p107, %s106, 31
        %s109 = smul.addr %s108, 8
        %s110 = scalar_lea.vmem %s0, %s109
        %s111 = smul.u32 16, %s8
      $region24: #{efficient_interaction_down_projection.1} parent=19 // pred_fallthru
        _
    $region20: #{efficient_interaction_down_projection.1} parent=5 // pred_fallthru
      _
    %p112 = scmp.le.s32.totalorder 1, %s8
    %p113 = scmp.lt.s32.totalorder %s8, 3
    %p114 = pnand %p112, %p113
    %p115 = pneg %p114
    // Predicated region
    $region25: #{efficient_interaction_down_projection.1} parent=5 // pred_check
      _
    $region26: #{efficient_interaction_down_projection.1} parent=5 // pred_check_branch
      %117 = sbr.rel (%p114) target = $region28
    $region27: #{efficient_interaction_down_projection.1} parent=5 // pred_region
      %s118 = ssub.s32 %s8, 1
      %s119 = smul.u32 16, %s13
      %p120 = scmp.lt.s32.totalorder %s119, 31
      %s121 = scalar_select %p120, %s119, 31
      %s122 = smul.addr %s121, 8
      %s123 = scalar_lea.vmem %s0, %s122
      %p124 = pneg %p34
      %p125 = pneg %p31
      %p126 = pneg %p55
      %p127 = pneg %p52
      %p128 = pneg %p81
      %p129 = pneg %p78
      %s130 = smul.u32 16, %s13
      %p131 = scmp.lt.s32.totalorder %s130, 31
      %s132 = scalar_select %p131, %s130, 31
      %s133 = smul.addr %s132, 8
      %s134 = scalar_lea.vmem %s2, %s133
      %s135 = smul.u32 16, %s13
      %p136 = scmp.lt.s32.totalorder %s135, 31
      %s137 = scalar_select %p136, %s135, 31
      %s138 = smul.addr %s137, 8
      %s139 = scalar_lea.vmem %s0, %s138
      %s140 = smul.u32 16, %s13
      %s141 = smul.u32 16, %s13
      %p142 = scmp.lt.s32.totalorder %s141, 31
      %s143 = scalar_select %p142, %s141, 31
      %s144 = smul.addr %s143, 8
      %s145 = scalar_lea.vmem %s2, %s144
      %s146 = smul.u32 16, %s13
      %v147 = vld [vmem:[%s139] sm:$0xff]
      %v148 = vld [vmem:[%s139 + $0x8] sm:$0xff]
      %v149 = vld [vmem:[%s139 + $0x10] sm:$0xff]
      %v150 = vld [vmem:[%s139 + $0x18] sm:$0xff]
      %v151 = vld [vmem:[%s139 + $0x20] sm:$0xff]
      %v152 = vld [vmem:[%s139 + $0x28] sm:$0xff]
      %v153 = vld [vmem:[%s139 + $0x30] sm:$0xff]
      %v154 = vld [vmem:[%s139 + $0x38] sm:$0xff]
      %v155 = vld [vmem:[%s139 + $0x40] sm:$0xff]
      %v156 = vld [vmem:[%s139 + $0x48] sm:$0xff]
      %v157 = vld [vmem:[%s139 + $0x50] sm:$0xff]
      %v158 = vld [vmem:[%s139 + $0x58] sm:$0xff]
      %v159 = vld [vmem:[%s139 + $0x60] sm:$0xff]
      %v160 = vld [vmem:[%s139 + $0x68] sm:$0xff]
      %v161 = vld [vmem:[%s139 + $0x70] sm:$0xff]
      %v162 = vld [vmem:[%s139 + $0x78] sm:$0xff]
      %v163 = vld [vmem:[%s1] sm:$0xff]
      %vm164 = vcmask 64512
      %v166 = vsel %vm164, %v147, 0
      %v169 = vsel %vm164, %v148, 0
      %v172 = vsel %vm164, %v149, 0
      %v175 = vsel %vm164, %v150, 0
      %v178 = vsel %vm164, %v151, 0
      %v181 = vsel %vm164, %v152, 0
      %v184 = vsel %vm164, %v153, 0
      %v187 = vsel %vm164, %v154, 0
      %v190 = vsel %vm164, %v155, 0
      %v193 = vsel %vm164, %v156, 0
      %v196 = vsel %vm164, %v157, 0
      %v199 = vsel %vm164, %v158, 0
      %v202 = vsel %vm164, %v159, 0
      %v205 = vsel %vm164, %v160, 0
      %v208 = vsel %vm164, %v161, 0
      %v211 = vsel %vm164, %v162, 0
      %213 = vmatprep.subr.mxu0 0.0
      %214 = vmatpush1.msra.mxu0 %v163
      %215 = vmatprep.subr.mxu0 0.0
      %216 = vmatpush1.msra.mxu0 0.0
      %217 = vmatprep.subr.mxu0 0.0
      %218 = vmatpush1.msra.mxu0 0.0
      %219 = vmatprep.subr.mxu0 0.0
      %220 = vmatpush1.msra.mxu0 0.0
      %221 = vmatprep.subr.mxu0 0.0
      %222 = vmatpush1.msra.mxu0 0.0
      %223 = vmatprep.subr.mxu0 0.0
      %224 = vmatpush1.msra.mxu0 0.0
      %225 = vmatprep.subr.mxu0 0.0
      %226 = vmatpush1.msra.mxu0 0.0
      %227 = vmatprep.subr.mxu0 0.0
      %228 = vmatpush1.msra.mxu0 0.0
      %229 = vmatprep.subr.mxu0 0.0
      %230 = vmatpush1.msra.mxu0 0.0
      %231 = vmatprep.subr.mxu0 0.0
      %232 = vmatpush1.msra.mxu0 0.0
      %233 = vmatprep.subr.mxu0 0.0
      %234 = vmatpush1.msra.mxu0 0.0
      %235 = vmatprep.subr.mxu0 0.0
      %236 = vmatpush1.msra.mxu0 0.0
      %237 = vmatprep.subr.mxu0 0.0
      %238 = vmatpush1.msra.mxu0 0.0
      %239 = vmatprep.subr.mxu0 0.0
      %240 = vmatpush1.msra.mxu0 0.0
      %241 = vmatprep.subr.mxu0 0.0
      %242 = vmatpush1.msra.mxu0 0.0
      %243 = vmatprep.subr.mxu0 0.0
      %244 = vmatpush1.msra.mxu0 0.0
      %245 = vmatprep.subr.mxu0 0.0
      %246 = vmatpush1.msra.mxu0 0.0
      %247 = vmatprep.subr.mxu0 0.0
      %248 = vmatpush1.msra.mxu0 0.0
      %249 = vmatprep.subr.mxu0 0.0
      %250 = vmatpush1.msra.mxu0 0.0
      %251 = vmatprep.subr.mxu0 0.0
      %252 = vmatpush1.msra.mxu0 0.0
      %253 = vmatprep.subr.mxu0 0.0
      %254 = vmatpush1.msra.mxu0 0.0
      %255 = vmatprep.subr.mxu0 0.0
      %256 = vmatpush1.msra.mxu0 0.0
      %257 = vmatprep.subr.mxu0 0.0
      %258 = vmatpush1.msra.mxu0 0.0
      %259 = vmatprep.subr.mxu0 0.0
      %260 = vmatpush1.msra.mxu0 0.0
      %261 = vmatprep.subr.mxu0 0.0
      %262 = vmatpush1.msra.mxu0 0.0
      %263 = vmatprep.subr.mxu0 0.0
      %264 = vmatpush1.msra.mxu0 0.0
      %265 = vmatprep.subr.mxu0 0.0
      %266 = vmatpush1.msra.mxu0 0.0
      %267 = vmatprep.subr.mxu0 0.0
      %268 = vmatpush1.msra.mxu0 0.0
      %269 = vmatprep.subr.mxu0 0.0
      %270 = vmatpush1.msra.mxu0 0.0
      %271 = vmatprep.subr.mxu0 0.0
      %272 = vmatpush1.msra.mxu0 0.0
      %273 = vmatprep.subr.mxu0 0.0
      %274 = vmatpush1.msra.mxu0 0.0
      %275 = vmatprep.subr.mxu0 0.0
      %276 = vmatpush1.msra.mxu0 0.0
      %277 = vmatprep.mubr.f32.mxu0 0.0
      %278 = vmatmul.mubr.f32.gmra.mrb[0].mxu0 %v166
      %v279 = vpop.f32.mrb[0].mxu0
      %v280 = vadd.f32 0.0, %v279
      %v281 = vpop.f32.mrb[0].mxu0
      %282 = vmatprep.mubr.f32.mxu0 0.0
      %283 = vmatmul.mubr.f32.gmra.mrb[0].mxu0 %v169
      %v284 = vpop.f32.mrb[0].mxu0
      %v285 = vadd.f32 0.0, %v284
      %v286 = vpop.f32.mrb[0].mxu0
      %287 = vmatprep.mubr.f32.mxu0 0.0
      %288 = vmatmul.mubr.f32.gmra.mrb[0].mxu0 %v172
      %v289 = vpop.f32.mrb[0].mxu0
      %v290 = vadd.f32 0.0, %v289
      %v291 = vpop.f32.mrb[0].mxu0
      %292 = vmatprep.mubr.f32.mxu0 0.0
      %293 = vmatmul.mubr.f32.gmra.mrb[0].mxu0 %v175
      %v294 = vpop.f32.mrb[0].mxu0
      %v295 = vadd.f32 0.0, %v294
      %v296 = vpop.f32.mrb[0].mxu0
      %297 = vmatprep.mubr.f32.mxu0 0.0
      %298 = vmatmul.mubr.f32.gmra.mrb[0].mxu0 %v178
      %v299 = vpop.f32.mrb[0].mxu0
      %v300 = vadd.f32 0.0, %v299
      %v301 = vpop.f32.mrb[0].mxu0
      %302 = vmatprep.mubr.f32.mxu0 0.0
      %303 = vmatmul.mubr.f32.gmra.mrb[0].mxu0 %v181
      %v304 = vpop.f32.mrb[0].mxu0
      %v305 = vadd.f32 0.0, %v304
      %v306 = vpop.f32.mrb[0].mxu0
      %307 = vmatprep.mubr.f32.mxu0 0.0
      %308 = vmatmul.mubr.f32.gmra.mrb[0].mxu0 %v184
      %v309 = vpop.f32.mrb[0].mxu0
      %v310 = vadd.f32 0.0, %v309
      %v311 = vpop.f32.mrb[0].mxu0
      %312 = vmatprep.mubr.f32.mxu0 0.0
      %313 = vmatmul.mubr.f32.gmra.mrb[0].mxu0 %v187
      %v314 = vpop.f32.mrb[0].mxu0
      %v315 = vadd.f32 0.0, %v314
      %v316 = vpop.f32.mrb[0].mxu0
      %317 = vmatprep.mubr.f32.mxu0 0.0
      %318 = vmatmul.mubr.f32.gmra.mrb[0].mxu0 %v190
      %v319 = vpop.f32.mrb[0].mxu0
      %v320 = vadd.f32 0.0, %v319
      %v321 = vpop.f32.mrb[0].mxu0
      %322 = vmatprep.mubr.f32.mxu0 0.0
      %323 = vmatmul.mubr.f32.gmra.mrb[0].mxu0 %v193
      %v324 = vpop.f32.mrb[0].mxu0
      %v325 = vadd.f32 0.0, %v324
      %v326 = vpop.f32.mrb[0].mxu0
      %327 = vmatprep.mubr.f32.mxu0 0.0
      %328 = vmatmul.mubr.f32.gmra.mrb[0].mxu0 %v196
      %v329 = vpop.f32.mrb[0].mxu0
      %v330 = vadd.f32 0.0, %v329
      %v331 = vpop.f32.mrb[0].mxu0
      %332 = vmatprep.mubr.f32.mxu0 0.0
      %333 = vmatmul.mubr.f32.gmra.mrb[0].mxu0 %v199
      %v334 = vpop.f32.mrb[0].mxu0
      %v335 = vadd.f32 0.0, %v334
      %v336 = vpop.f32.mrb[0].mxu0
      %337 = vmatprep.mubr.f32.mxu0 0.0
      %338 = vmatmul.mubr.f32.gmra.mrb[0].mxu0 %v202
      %v339 = vpop.f32.mrb[0].mxu0
      %v340 = vadd.f32 0.0, %v339
      %v341 = vpop.f32.mrb[0].mxu0
      %342 = vmatprep.mubr.f32.mxu0 0.0
      %343 = vmatmul.mubr.f32.gmra.mrb[0].mxu0 %v205
      %v344 = vpop.f32.mrb[0].mxu0
      %v345 = vadd.f32 0.0, %v344
      %v346 = vpop.f32.mrb[0].mxu0
      %347 = vmatprep.mubr.f32.mxu0 0.0
      %348 = vmatmul.mubr.f32.gmra.mrb[0].mxu0 %v208
      %v349 = vpop.f32.mrb[0].mxu0
      %v350 = vadd.f32 0.0, %v349
      %v351 = vpop.f32.mrb[0].mxu0
      %352 = vmatprep.mubr.f32.mxu0 0.0
      %353 = vmatmul.mubr.f32.gmra.mrb[0].mxu0 %v211
      %v354 = vpop.f32.mrb[0].mxu0
      %v355 = vadd.f32 0.0, %v354
      %v356 = vpop.f32.mrb[0].mxu0
      %357 = vdwg.mxu0
      %358 = vst [vmem:[%s145] sm:$0xff] %v280
      %359 = vst [vmem:[%s145 + $0x8] sm:$0xff] %v285
      %360 = vst [vmem:[%s145 + $0x10] sm:$0xff] %v290
      %361 = vst [vmem:[%s145 + $0x18] sm:$0xff] %v295
      %362 = vst [vmem:[%s145 + $0x20] sm:$0xff] %v300
      %363 = vst [vmem:[%s145 + $0x28] sm:$0xff] %v305
      %364 = vst [vmem:[%s145 + $0x30] sm:$0xff] %v310
      %365 = vst [vmem:[%s145 + $0x38] sm:$0xff] %v315
      %366 = vst [vmem:[%s145 + $0x40] sm:$0xff] %v320
      %367 = vst [vmem:[%s145 + $0x48] sm:$0xff] %v325
      %368 = vst [vmem:[%s145 + $0x50] sm:$0xff] %v330
      %369 = vst [vmem:[%s145 + $0x58] sm:$0xff] %v335
      %370 = vst [vmem:[%s145 + $0x60] sm:$0xff] %v340
      %371 = vst [vmem:[%s145 + $0x68] sm:$0xff] %v345
      %372 = vst [vmem:[%s145 + $0x70] sm:$0xff] %v350
      %373 = vst [vmem:[%s145 + $0x78] sm:$0xff] %v355
      %s374 = smul.u32 16, %s13
      %p375 = scmp.lt.s32.totalorder %s374, 31
      %s376 = scalar_select %p375, %s374, 31
      %s377 = smul.addr %s376, 8
      %s378 = scalar_lea.vmem %s2, %s377
      // Predicated region
      $region29: #{efficient_interaction_down_projection.1} parent=27 // pred_check
        %p379 = pneg %p78
      $region30: #{efficient_interaction_down_projection.1} parent=27 // pred_check_branch
        %381 = sbr.rel (%p379) target = $region32
      $region31: #{efficient_interaction_down_projection.1} parent=27 // pred_region
        %s382 = smul.u32 16, %s13
      $region32: #{efficient_interaction_down_projection.1} parent=27 // pred_fallthru
        _
    $region28: #{efficient_interaction_down_projection.1} parent=5 // pred_fallthru
      _
    %p383 = scmp.le.s32.totalorder 2, %s8
    // Predicated region
    $region33: #{efficient_interaction_down_projection.1} parent=5 // pred_check
      %p384 = pneg %p383
    $region34: #{efficient_interaction_down_projection.1} parent=5 // pred_check_branch
      %386 = sbr.rel (%p384) target = $region36
    $region35: #{efficient_interaction_down_projection.1} parent=5 // pred_region
      %s387 = ssub.s32 %s8, 2
      // Predicated region
      $region37: #{efficient_interaction_down_projection.1} parent=35 // pred_check
        %p388 = pneg %p84
      $region38: #{efficient_interaction_down_projection.1} parent=35 // pred_check_branch
        %390 = sbr.rel (%p388) target = $region40
      $region39: #{efficient_interaction_down_projection.1} parent=35 // pred_region
        %s391 = smul.u32 16, %s14
        %p392 = scmp.lt.s32.totalorder %s391, 31
        %s393 = scalar_select %p392, %s391, 31
        %s394 = smul.addr %s393, 8
        %s395 = scalar_lea.vmem %s2, %s394
      $region40: #{efficient_interaction_down_projection.1} parent=35 // pred_fallthru
        _
    $region36: #{efficient_interaction_down_projection.1} parent=5 // pred_fallthru
      _
  $region6: #{efficient_interaction_down_projection.1} parent=0 // loop_footer
    %s12 = sadd.s32 1, %s8
  $region7: #{efficient_interaction_down_projection.1} parent=0 // loop_footer_branch
    %7 = sbr.rel target = $region3
  $region8: #{efficient_interaction_down_projection.1} parent=0 // loop_exit
    _

</llo_original>
